<compile_context>
chip_gen: v7x
topology: tpu7x:2x2x1
jax: 0.10.0
libtpu: 0.0.40
codegen_flags: <defaults>
</compile_context>

<pallas_src>
import jax
import jax.numpy as jnp
from jax.experimental import pallas as pl
from jax.experimental.pallas import tpu as pltpu

SUBLANE = 8


def _round_up(v, m):
    return ((v + m - 1) // m) * m


def mlp_kernel(x_ref, w1_ref, b1_ref, w2_ref, b2_ref, w3_ref, b3_ref, o_ref):
    # Layer 1: Linear + bias + ReLU (f32 throughout; MXU accumulates in f32).
    h1 = jnp.dot(x_ref[...], w1_ref[...], preferred_element_type=jnp.float32)
    h1 = jnp.maximum(h1 + b1_ref[...], 0.0)

    # Layer 2: Linear + bias + ReLU.
    h2 = jnp.dot(h1, w2_ref[...], preferred_element_type=jnp.float32)
    h2 = jnp.maximum(h2 + b2_ref[...], 0.0)

    # Layer 3: Linear -> softmax (== exp(log_softmax), numerically identical).
    logits = jnp.dot(h2, w3_ref[...], preferred_element_type=jnp.float32) + b3_ref[...]
    m = jnp.max(logits, axis=-1, keepdims=True)
    p = jnp.exp(logits - m)
    denom = jnp.sum(p, axis=-1, keepdims=True)
    o_ref[...] = p / denom  # exact normalization: rows sum to 1 within f32 rounding


def mlp_forward(x, w1, b1, w2, b2, w3, b3, *, max_tm=4096):
    """x: (N, state_dim) f32. Weights: (in, out) f32. Biases: (1, out) f32.
    Returns (N, action_num) f32 action probabilities."""
    N, state_dim = x.shape
    hidden_dim = w1.shape[1]
    action_num = w3.shape[1]

    # --- Batch tiling: 8-aligned tile. ---
    n_aligned = max(SUBLANE, _round_up(N, SUBLANE))
    TM = min(_round_up(max_tm, SUBLANE), n_aligned)
    # v7x megacore: if the whole batch would be one grid step and there are >=16 rows,
    # split it so the "parallel" batch axis can shard across both TensorCores.
    if pl.cdiv(n_aligned, TM) == 1 and n_aligned >= 2 * SUBLANE:
        TM = _round_up(n_aligned // 2, SUBLANE)

    n_pad = pl.cdiv(N, TM) * TM
    xp = jnp.pad(x, ((0, n_pad - N), (0, 0))) if n_pad != N else x

    def const(shape):
        # Resident operand: same block for every grid step -> DMA'd once.
        return pl.BlockSpec(shape, lambda i: (0, 0))

    out = pl.pallas_call(
        mlp_kernel,
        out_shape=jax.ShapeDtypeStruct((n_pad, action_num), jnp.float32),
        grid=(n_pad // TM,),
        in_specs=[
            pl.BlockSpec((TM, state_dim), lambda i: (i, 0)),   # x tile (pipelined)
            const((state_dim, hidden_dim)),                    # w1
            const((1, hidden_dim)),                            # b1
            const((hidden_dim, hidden_dim)),                   # w2
            const((1, hidden_dim)),                            # b2
            const((hidden_dim, action_num)),                   # w3 (natural width)
            const((1, action_num)),                            # b3 (natural width)
        ],
        out_specs=pl.BlockSpec((TM, action_num), lambda i: (i, 0)),
        compiler_params=pltpu.CompilerParams(
            dimension_semantics=("parallel",),          # shard batch axis across TCs
            vmem_limit_bytes=32 * 1024 * 1024,          # safe on v5e/v6e/v7x (64 MiB)
        ),
    )(xp, w1, b1, w2, b2, w3, b3)

    return out[:N] if n_pad != N else out


def mlp_reference(x, w1, b1, w2, b2, w3, b3):
    """Pure-JAX f32 reference (eval-mode dropout = identity)."""
    h1 = jnp.maximum(x @ w1 + b1, 0.0)
    h2 = jnp.maximum(h1 @ w2 + b2, 0.0)
    return jax.nn.softmax(h2 @ w3 + b3, axis=-1)


def init_params(key, state_dim, action_num, hidden_dim):
    """Deterministic init mimicking nn.Linear default (uniform +/- 1/sqrt(fan_in))."""
    ks = jax.random.split(key, 6)

    def linear(kw, kb, fan_in, fan_out):
        bound = 1.0 / jnp.sqrt(fan_in)
        w = jax.random.uniform(kw, (fan_in, fan_out), jnp.float32, -bound, bound)
        b = jax.random.uniform(kb, (1, fan_out), jnp.float32, -bound, bound)
        return w, b

    w1, b1 = linear(ks[0], ks[1], state_dim, hidden_dim)
    w2, b2 = linear(ks[2], ks[3], hidden_dim, hidden_dim)
    w3, b3 = linear(ks[4], ks[5], hidden_dim, action_num)
    return w1, b1, w2, b2, w3, b3


if __name__ == "__main__":
    state_dim, action_num, hidden_dim = 16, 8, 32
    N = 20  # non-multiple of 8 -> exercises row padding

    key = jax.random.PRNGKey(0)
    k_x, k_p = jax.random.split(key)
    x = jax.random.normal(k_x, (N, state_dim), jnp.float32)
    params = init_params(k_p, state_dim, action_num, hidden_dim)

    # Small max_tm to force a multi-step batch grid in this tiny example.
    out = mlp_forward(x, *params, max_tm=8)
    out = jax.block_until_ready(out)

    ref = mlp_reference(x, *params)

    assert out.shape == (N, action_num)
    row_sums = jnp.sum(out, axis=-1)
    assert jnp.allclose(row_sums, jnp.ones_like(row_sums), atol=1e-4), row_sums
    assert jnp.allclose(out, ref, atol=1e-4), float(jnp.max(jnp.abs(out - ref)))

    # Also exercise the default (large-tile / auto-split) path.
    out2 = jax.block_until_ready(mlp_forward(x, *params))
    assert jnp.allclose(out2, ref, atol=1e-4)

    print("KERNEL_OK")
</pallas_src>

<mosaic_0001>
module attributes {stable_mosaic.version = 11 : i64} {
  func.func @mlp_kernel(%arg0: i32, %arg1: memref<8x16xf32, #tpu.memory_space<vmem>>, %arg2: memref<16x32xf32, #tpu.memory_space<vmem>>, %arg3: memref<1x32xf32, #tpu.memory_space<vmem>>, %arg4: memref<32x32xf32, #tpu.memory_space<vmem>>, %arg5: memref<1x32xf32, #tpu.memory_space<vmem>>, %arg6: memref<32x8xf32, #tpu.memory_space<vmem>>, %arg7: memref<1x8xf32, #tpu.memory_space<vmem>>, %arg8: memref<8x8xf32, #tpu.memory_space<vmem>>) attributes {dimension_semantics = [#tpu.dimension_semantics<parallel>], iteration_bounds = array<i64: 3>, scalar_prefetch = 0 : i64, scratch_operands = 0 : i64, tpu.core_type = #tpu.core_type<tc>, window_params = [{transform_indices = @transform_0, window_bounds = array<i64: 8, 16>}, {pipeline_mode = #tpu.pipeline_mode<synchronous>, transform_indices = @transform_1, window_bounds = array<i64: 16, 32>}, {pipeline_mode = #tpu.pipeline_mode<synchronous>, transform_indices = @transform_2, window_bounds = array<i64: 1, 32>}, {pipeline_mode = #tpu.pipeline_mode<synchronous>, transform_indices = @transform_3, window_bounds = array<i64: 32, 32>}, {pipeline_mode = #tpu.pipeline_mode<synchronous>, transform_indices = @transform_4, window_bounds = array<i64: 1, 32>}, {pipeline_mode = #tpu.pipeline_mode<synchronous>, transform_indices = @transform_5, window_bounds = array<i64: 32, 8>}, {pipeline_mode = #tpu.pipeline_mode<synchronous>, transform_indices = @transform_6, window_bounds = array<i64: 1, 8>}, {transform_indices = @transform_7, window_bounds = array<i64: 8, 8>}]} {
    %c0 = arith.constant 0 : index
    %c0_0 = arith.constant 0 : index
    %0 = vector.load %arg1[%c0, %c0_0] : memref<8x16xf32, #tpu.memory_space<vmem>>, vector<8x16xf32>
    %c0_1 = arith.constant 0 : index
    %c0_2 = arith.constant 0 : index
    %1 = vector.load %arg2[%c0_1, %c0_2] : memref<16x32xf32, #tpu.memory_space<vmem>>, vector<16x32xf32>
    %cst = arith.constant dense<0.000000e+00> : vector<8x32xf32>
    %2 = tpu.matmul %0, %1, %cst {dimension_numbers = #tpu.dot_dimension_numbers<[1], [0], [0], [1], [0, 0, 1, 1], [], []>} : vector<8x16xf32>, vector<16x32xf32>, vector<8x32xf32> -> vector<8x32xf32>
    %c0_3 = arith.constant 0 : index
    %c0_4 = arith.constant 0 : index
    %3 = vector.load %arg3[%c0_3, %c0_4] : memref<1x32xf32, #tpu.memory_space<vmem>>, vector<1x32xf32>
    %4 = vector.broadcast %3 : vector<1x32xf32> to vector<8x32xf32>
    %5 = arith.addf %2, %4 : vector<8x32xf32>
    %cst_5 = arith.constant 0.000000e+00 : f32
    %6 = vector.broadcast %cst_5 : f32 to vector<8x32xf32>
    %7 = arith.maximumf %5, %6 : vector<8x32xf32>
    %c0_6 = arith.constant 0 : index
    %c0_7 = arith.constant 0 : index
    %8 = vector.load %arg4[%c0_6, %c0_7] : memref<32x32xf32, #tpu.memory_space<vmem>>, vector<32x32xf32>
    %cst_8 = arith.constant dense<0.000000e+00> : vector<8x32xf32>
    %9 = tpu.matmul %7, %8, %cst_8 {dimension_numbers = #tpu.dot_dimension_numbers<[1], [0], [0], [1], [0, 0, 1, 1], [], []>} : vector<8x32xf32>, vector<32x32xf32>, vector<8x32xf32> -> vector<8x32xf32>
    %c0_9 = arith.constant 0 : index
    %c0_10 = arith.constant 0 : index
    %10 = vector.load %arg5[%c0_9, %c0_10] : memref<1x32xf32, #tpu.memory_space<vmem>>, vector<1x32xf32>
    %11 = vector.broadcast %10 : vector<1x32xf32> to vector<8x32xf32>
    %12 = arith.addf %9, %11 : vector<8x32xf32>
    %cst_11 = arith.constant 0.000000e+00 : f32
    %13 = vector.broadcast %cst_11 : f32 to vector<8x32xf32>
    %14 = arith.maximumf %12, %13 : vector<8x32xf32>
    %c0_12 = arith.constant 0 : index
    %c0_13 = arith.constant 0 : index
    %15 = vector.load %arg6[%c0_12, %c0_13] : memref<32x8xf32, #tpu.memory_space<vmem>>, vector<32x8xf32>
    %cst_14 = arith.constant dense<0.000000e+00> : vector<8x8xf32>
    %16 = tpu.matmul %14, %15, %cst_14 {dimension_numbers = #tpu.dot_dimension_numbers<[1], [0], [0], [1], [0, 0, 1, 1], [], []>} : vector<8x32xf32>, vector<32x8xf32>, vector<8x8xf32> -> vector<8x8xf32>
    %c0_15 = arith.constant 0 : index
    %c0_16 = arith.constant 0 : index
    %17 = vector.load %arg7[%c0_15, %c0_16] : memref<1x8xf32, #tpu.memory_space<vmem>>, vector<1x8xf32>
    %18 = vector.broadcast %17 : vector<1x8xf32> to vector<8x8xf32>
    %19 = arith.addf %16, %18 : vector<8x8xf32>
    %cst_17 = arith.constant dense<0xFF800000> : vector<8xf32>
    %20 = vector.multi_reduction <maximumf>, %19, %cst_17 [1] : vector<8x8xf32> to vector<8xf32>
    %21 = vector.shape_cast %20 : vector<8xf32> to vector<8x1xf32>
    %22 = vector.broadcast %21 : vector<8x1xf32> to vector<8x8xf32>
    %23 = arith.subf %19, %22 : vector<8x8xf32>
    %24 = math.exp %23 : vector<8x8xf32>
    %cst_18 = arith.constant dense<0.000000e+00> : vector<8xf32>
    %25 = vector.multi_reduction <add>, %24, %cst_18 [1] : vector<8x8xf32> to vector<8xf32>
    %26 = vector.shape_cast %25 : vector<8xf32> to vector<8x1xf32>
    %27 = vector.broadcast %26 : vector<8x1xf32> to vector<8x8xf32>
    %28 = arith.divf %24, %27 : vector<8x8xf32>
    %c0_19 = arith.constant 0 : index
    %c0_20 = arith.constant 0 : index
    %29 = vector.load %arg8[%c0_19, %c0_20] : memref<8x8xf32, #tpu.memory_space<vmem>>, vector<8x8xf32>
    tpu.vector_store %arg8[%c0_19, %c0_20], %28 {strides = array<i32>} : memref<8x8xf32, #tpu.memory_space<vmem>>, vector<8x8xf32>,
    return
  }
  func.func @transform_0(%arg0: i32) -> (i32, i32) {
    %c0_i32 = arith.constant 0 : i32
    %c0_i32_0 = arith.constant 0 : i32
    return %arg0, %c0_i32 : i32, i32
  }
  func.func @transform_1(%arg0: i32) -> (i32, i32) {
    %c0_i32 = arith.constant 0 : i32
    %c0_i32_0 = arith.constant 0 : i32
    %c0_i32_1 = arith.constant 0 : i32
    return %c0_i32, %c0_i32_0 : i32, i32
  }
  func.func @transform_2(%arg0: i32) -> (i32, i32) {
    %c0_i32 = arith.constant 0 : i32
    %c0_i32_0 = arith.constant 0 : i32
    %c0_i32_1 = arith.constant 0 : i32
    return %c0_i32, %c0_i32_0 : i32, i32
  }
  func.func @transform_3(%arg0: i32) -> (i32, i32) {
    %c0_i32 = arith.constant 0 : i32
    %c0_i32_0 = arith.constant 0 : i32
    %c0_i32_1 = arith.constant 0 : i32
    return %c0_i32, %c0_i32_0 : i32, i32
  }
  func.func @transform_4(%arg0: i32) -> (i32, i32) {
    %c0_i32 = arith.constant 0 : i32
    %c0_i32_0 = arith.constant 0 : i32
    %c0_i32_1 = arith.constant 0 : i32
    return %c0_i32, %c0_i32_0 : i32, i32
  }
  func.func @transform_5(%arg0: i32) -> (i32, i32) {
    %c0_i32 = arith.constant 0 : i32
    %c0_i32_0 = arith.constant 0 : i32
    %c0_i32_1 = arith.constant 0 : i32
    return %c0_i32, %c0_i32_0 : i32, i32
  }
  func.func @transform_6(%arg0: i32) -> (i32, i32) {
    %c0_i32 = arith.constant 0 : i32
    %c0_i32_0 = arith.constant 0 : i32
    %c0_i32_1 = arith.constant 0 : i32
    return %c0_i32, %c0_i32_0 : i32, i32
  }
  func.func @transform_7(%arg0: i32) -> (i32, i32) {
    %c0_i32 = arith.constant 0 : i32
    %c0_i32_0 = arith.constant 0 : i32
    return %arg0, %c0_i32 : i32, i32
  }
}

</mosaic_0001>

<llo_original>
// kernel: tpu_custom_call.1
$region0: #{tpu_custom_call.1}
  #allocation0 [shape = 'u32[]', space=smem, size = 0x4, offset = 0x4, fixed_abs, tag = 'smem constant byte address 0x4 - core index']
  #allocation1 [shape = 'u32[144,128]{1,0:T(1,128)}', space=vmem, size = 0x12000, scoped, tag = 'internal scratch']
  %s0 = inlined_call_operand.vmem [shape: f32[24,16], index: 0, kind: input, shape index: {}]
  %s1 = inlined_call_operand.vmem [shape: f32[16,32], index: 1, kind: input, shape index: {}]
  %s2 = inlined_call_operand.vmem [shape: f32[1,32], index: 2, kind: input, shape index: {}]
  %s3 = inlined_call_operand.vmem [shape: f32[32,32], index: 3, kind: input, shape index: {}]
  %s4 = inlined_call_operand.vmem [shape: f32[1,32], index: 4, kind: input, shape index: {}]
  %s5 = inlined_call_operand.vmem [shape: f32[32,8], index: 5, kind: input, shape index: {}]
  %s6 = inlined_call_operand.vmem [shape: f32[1,8], index: 6, kind: input, shape index: {}]
  %s7 = inlined_call_operand.vmem [shape: f32[24,8], index: 7, kind: output, shape index: {}]
  %s8 = sld [smem:[#allocation0]]
  $region61: #{tpu_custom_call.1} parent=0
    _
  %s10 = ssub.s32 1, %s8
  %s11 = scalar_select 0, %s10, %s8
  loop: start=0, step=1, limit=5
  $region2: #{tpu_custom_call.1} parent=0 // loop_pre_header
    _
  $region3: #{tpu_custom_call.1} parent=0 // loop_header
    %s13 = sphi 0, %s17
    %p14 = scmp.ge.s32.totalorder %s13, 5
    %s23 = sphi 0, %s25
    %s26 = sphi 0, %s23
    %s27 = sphi 0, %s26
    %s43 = sphi 0, %s27
    %s47 = sphi 0, %s47
    %s49 = sphi 0, %s47
    %s50 = sphi 0, %s49
    %s64 = sphi 0, %s50
    %s68 = sphi 0, %s68
    %s70 = sphi 0, %s68
    %s71 = sphi 0, %s70
    %s85 = sphi 0, %s71
    %s89 = sphi 0, %s89
    %s91 = sphi 0, %s89
    %s92 = sphi 0, %s91
    %s106 = sphi 0, %s92
    %s110 = sphi 0, %s110
    %s112 = sphi 0, %s110
    %s113 = sphi 0, %s112
    %s127 = sphi 0, %s113
    %s131 = sphi 0, %s131
    %s133 = sphi 0, %s131
    %s134 = sphi 0, %s133
    %s148 = sphi 0, %s134
    %s152 = sphi 0, %s152
    %s154 = sphi 0, %s152
    %s155 = sphi 0, %s154
    %s169 = sphi 0, %s155
    %s175 = sphi 0, %s177
    %s178 = sphi 0, %s175
    %s179 = sphi 0, %s178
    %s195 = sphi 0, %s179
  $region4: #{tpu_custom_call.1} parent=0 // loop_header_branch
    %16 = sbr.rel (%p14) target = $region8
  $region5: #{tpu_custom_call.1} parent=0 // loop_body
    %s18 = ssub.s32 %s13, 1
    %s19 = ssub.s32 %s13, 2
    %s20 = sadd.s32 %s13, 1
    %s21 = ssub.s32 %s13, %s20
    %p22 = scmp.eq.s32.totalorder %s21, 0
    %s24 = sadd.s32 %s23, 1
    %s25 = scalar_select %p22, %s23, %s24
    %p28 = pneg %p22
    %p29 = scmp.eq.s32.totalorder %s13, 2
    %p30 = por %p28, %p29
    %p31 = scmp.ne.s32.totalorder %s23, %s26
    %p32 = scmp.eq.s32.totalorder %s13, 0
    %p33 = por %p31, %p32
    %p34 = scmp.ne.s32.totalorder %s23, %s26
    %p35 = scmp.eq.s32.totalorder %s18, 2
    %p36 = por %p34, %p35
    %p37 = scmp.ne.s32.totalorder %s26, %s27
    %p38 = scmp.eq.s32.totalorder %s18, 0
    %p39 = por %p37, %p38
    %p40 = scmp.ne.s32.totalorder %s26, %s27
    %p41 = scmp.eq.s32.totalorder %s19, 2
    %p42 = por %p40, %p41
    %p44 = scmp.ne.s32.totalorder %s27, %s43
    %p45 = scmp.eq.s32.totalorder %s19, 0
    %p46 = por %p44, %p45
    %s48 = sadd.s32 %s47, 1
    %p51 = scmp.eq.s32.totalorder %s13, 2
    %p52 = scmp.ne.s32.totalorder %s47, %s49
    %p53 = scmp.eq.s32.totalorder %s13, 0
    %p54 = por %p52, %p53
    %p55 = scmp.ne.s32.totalorder %s47, %s49
    %p56 = scmp.eq.s32.totalorder %s18, 2
    %p57 = por %p55, %p56
    %p58 = scmp.ne.s32.totalorder %s49, %s50
    %p59 = scmp.eq.s32.totalorder %s18, 0
    %p60 = por %p58, %p59
    %p61 = scmp.ne.s32.totalorder %s49, %s50
    %p62 = scmp.eq.s32.totalorder %s19, 2
    %p63 = por %p61, %p62
    %p65 = scmp.ne.s32.totalorder %s50, %s64
    %p66 = scmp.eq.s32.totalorder %s19, 0
    %p67 = por %p65, %p66
    %s69 = sadd.s32 %s68, 1
    %p72 = scmp.eq.s32.totalorder %s13, 2
    %p73 = scmp.ne.s32.totalorder %s68, %s70
    %p74 = scmp.eq.s32.totalorder %s13, 0
    %p75 = por %p73, %p74
    %p76 = scmp.ne.s32.totalorder %s68, %s70
    %p77 = scmp.eq.s32.totalorder %s18, 2
    %p78 = por %p76, %p77
    %p79 = scmp.ne.s32.totalorder %s70, %s71
    %p80 = scmp.eq.s32.totalorder %s18, 0
    %p81 = por %p79, %p80
    %p82 = scmp.ne.s32.totalorder %s70, %s71
    %p83 = scmp.eq.s32.totalorder %s19, 2
    %p84 = por %p82, %p83
    %p86 = scmp.ne.s32.totalorder %s71, %s85
    %p87 = scmp.eq.s32.totalorder %s19, 0
    %p88 = por %p86, %p87
    %s90 = sadd.s32 %s89, 1
    %p93 = scmp.eq.s32.totalorder %s13, 2
    %p94 = scmp.ne.s32.totalorder %s89, %s91
    %p95 = scmp.eq.s32.totalorder %s13, 0
    %p96 = por %p94, %p95
    %p97 = scmp.ne.s32.totalorder %s89, %s91
    %p98 = scmp.eq.s32.totalorder %s18, 2
    %p99 = por %p97, %p98
    %p100 = scmp.ne.s32.totalorder %s91, %s92
    %p101 = scmp.eq.s32.totalorder %s18, 0
    %p102 = por %p100, %p101
    %p103 = scmp.ne.s32.totalorder %s91, %s92
    %p104 = scmp.eq.s32.totalorder %s19, 2
    %p105 = por %p103, %p104
    %p107 = scmp.ne.s32.totalorder %s92, %s106
    %p108 = scmp.eq.s32.totalorder %s19, 0
    %p109 = por %p107, %p108
    %s111 = sadd.s32 %s110, 1
    %p114 = scmp.eq.s32.totalorder %s13, 2
    %p115 = scmp.ne.s32.totalorder %s110, %s112
    %p116 = scmp.eq.s32.totalorder %s13, 0
    %p117 = por %p115, %p116
    %p118 = scmp.ne.s32.totalorder %s110, %s112
    %p119 = scmp.eq.s32.totalorder %s18, 2
    %p120 = por %p118, %p119
    %p121 = scmp.ne.s32.totalorder %s112, %s113
    %p122 = scmp.eq.s32.totalorder %s18, 0
    %p123 = por %p121, %p122
    %p124 = scmp.ne.s32.totalorder %s112, %s113
    %p125 = scmp.eq.s32.totalorder %s19, 2
    %p126 = por %p124, %p125
    %p128 = scmp.ne.s32.totalorder %s113, %s127
    %p129 = scmp.eq.s32.totalorder %s19, 0
    %p130 = por %p128, %p129
    %s132 = sadd.s32 %s131, 1
    %p135 = scmp.eq.s32.totalorder %s13, 2
    %p136 = scmp.ne.s32.totalorder %s131, %s133
    %p137 = scmp.eq.s32.totalorder %s13, 0
    %p138 = por %p136, %p137
    %p139 = scmp.ne.s32.totalorder %s131, %s133
    %p140 = scmp.eq.s32.totalorder %s18, 2
    %p141 = por %p139, %p140
    %p142 = scmp.ne.s32.totalorder %s133, %s134
    %p143 = scmp.eq.s32.totalorder %s18, 0
    %p144 = por %p142, %p143
    %p145 = scmp.ne.s32.totalorder %s133, %s134
    %p146 = scmp.eq.s32.totalorder %s19, 2
    %p147 = por %p145, %p146
    %p149 = scmp.ne.s32.totalorder %s134, %s148
    %p150 = scmp.eq.s32.totalorder %s19, 0
    %p151 = por %p149, %p150
    %s153 = sadd.s32 %s152, 1
    %p156 = scmp.eq.s32.totalorder %s13, 2
    %p157 = scmp.ne.s32.totalorder %s152, %s154
    %p158 = scmp.eq.s32.totalorder %s13, 0
    %p159 = por %p157, %p158
    %p160 = scmp.ne.s32.totalorder %s152, %s154
    %p161 = scmp.eq.s32.totalorder %s18, 2
    %p162 = por %p160, %p161
    %p163 = scmp.ne.s32.totalorder %s154, %s155
    %p164 = scmp.eq.s32.totalorder %s18, 0
    %p165 = por %p163, %p164
    %p166 = scmp.ne.s32.totalorder %s154, %s155
    %p167 = scmp.eq.s32.totalorder %s19, 2
    %p168 = por %p166, %p167
    %p170 = scmp.ne.s32.totalorder %s155, %s169
    %p171 = scmp.eq.s32.totalorder %s19, 0
    %p172 = por %p170, %p171
    %s173 = ssub.s32 %s13, %s20
    %p174 = scmp.eq.s32.totalorder %s173, 0
    %s176 = sadd.s32 %s175, 1
    %s177 = scalar_select %p174, %s175, %s176
    %p180 = pneg %p174
    %p181 = scmp.eq.s32.totalorder %s13, 2
    %p182 = por %p180, %p181
    %p183 = scmp.ne.s32.totalorder %s175, %s178
    %p184 = scmp.eq.s32.totalorder %s13, 0
    %p185 = por %p183, %p184
    %p186 = scmp.ne.s32.totalorder %s175, %s178
    %p187 = scmp.eq.s32.totalorder %s18, 2
    %p188 = por %p186, %p187
    %p189 = scmp.ne.s32.totalorder %s178, %s179
    %p190 = scmp.eq.s32.totalorder %s18, 0
    %p191 = por %p189, %p190
    %p192 = scmp.ne.s32.totalorder %s178, %s179
    %p193 = scmp.eq.s32.totalorder %s19, 2
    %p194 = por %p192, %p193
    %p196 = scmp.ne.s32.totalorder %s179, %s195
    %p197 = scmp.eq.s32.totalorder %s19, 0
    %p198 = por %p196, %p197
    %p199 = scmp.le.s32.totalorder 1, %s13
    %p200 = scmp.lt.s32.totalorder %s13, 4
    %p201 = pnand %p199, %p200
    %p202 = pneg %p201
    // Predicated region
    $region9: #{tpu_custom_call.1} parent=5 // pred_check
      _
    $region10: #{tpu_custom_call.1} parent=5 // pred_check_branch
      %204 = sbr.rel (%p201) target = $region12
    $region11: #{tpu_custom_call.1} parent=5 // pred_region
      %s205 = ssub.s32 %s13, 1
      // Predicated region
      $region13: #{tpu_custom_call.1} parent=11 // pred_check
        %p206 = pneg %p60
      $region14: #{tpu_custom_call.1} parent=11 // pred_check_branch
        %208 = sbr.rel (%p206) target = $region16
      $region15: #{tpu_custom_call.1} parent=11 // pred_region
        _
      $region16: #{tpu_custom_call.1} parent=11 // pred_fallthru
        _
      // Predicated region
      $region17: #{tpu_custom_call.1} parent=11 // pred_check
        %p209 = pneg %p81
      $region18: #{tpu_custom_call.1} parent=11 // pred_check_branch
        %211 = sbr.rel (%p209) target = $region20
      $region19: #{tpu_custom_call.1} parent=11 // pred_region
        _
      $region20: #{tpu_custom_call.1} parent=11 // pred_fallthru
        _
      // Predicated region
      $region21: #{tpu_custom_call.1} parent=11 // pred_check
        %p212 = pneg %p102
      $region22: #{tpu_custom_call.1} parent=11 // pred_check_branch
        %214 = sbr.rel (%p212) target = $region24
      $region23: #{tpu_custom_call.1} parent=11 // pred_region
        _
      $region24: #{tpu_custom_call.1} parent=11 // pred_fallthru
        _
      // Predicated region
      $region25: #{tpu_custom_call.1} parent=11 // pred_check
        %p215 = pneg %p123
      $region26: #{tpu_custom_call.1} parent=11 // pred_check_branch
        %217 = sbr.rel (%p215) target = $region28
      $region27: #{tpu_custom_call.1} parent=11 // pred_region
        _
      $region28: #{tpu_custom_call.1} parent=11 // pred_fallthru
        _
      // Predicated region
      $region29: #{tpu_custom_call.1} parent=11 // pred_check
        %p218 = pneg %p144
      $region30: #{tpu_custom_call.1} parent=11 // pred_check_branch
        %220 = sbr.rel (%p218) target = $region32
      $region31: #{tpu_custom_call.1} parent=11 // pred_region
        _
      $region32: #{tpu_custom_call.1} parent=11 // pred_fallthru
        _
      // Predicated region
      $region33: #{tpu_custom_call.1} parent=11 // pred_check
        %p221 = pneg %p165
      $region34: #{tpu_custom_call.1} parent=11 // pred_check_branch
        %223 = sbr.rel (%p221) target = $region36
      $region35: #{tpu_custom_call.1} parent=11 // pred_region
        _
      $region36: #{tpu_custom_call.1} parent=11 // pred_fallthru
        _
    $region12: #{tpu_custom_call.1} parent=5 // pred_fallthru
      _
    %p224 = scmp.lt.s32.totalorder %s13, 3
    // Predicated region
    $region37: #{tpu_custom_call.1} parent=5 // pred_check
      %p225 = pneg %p224
    $region38: #{tpu_custom_call.1} parent=5 // pred_check_branch
      %227 = sbr.rel (%p225) target = $region40
    $region39: #{tpu_custom_call.1} parent=5 // pred_region
      // Predicated region
      $region41: #{tpu_custom_call.1} parent=39 // pred_check
        %p228 = pneg %p33
      $region42: #{tpu_custom_call.1} parent=39 // pred_check_branch
        %230 = sbr.rel (%p228) target = $region44
      $region43: #{tpu_custom_call.1} parent=39 // pred_region
        %p231 = scmp.lt.s32.totalorder %s13, 2
        %s232 = scalar_select %p231, %s13, 2
        %s233 = smul.addr %s232, 8
        %s234 = scalar_lea.vmem %s0, %s233
      $region44: #{tpu_custom_call.1} parent=39 // pred_fallthru
        _
    $region40: #{tpu_custom_call.1} parent=5 // pred_fallthru
      _
    %p235 = scmp.le.s32.totalorder 1, %s13
    %p236 = scmp.lt.s32.totalorder %s13, 4
    %p237 = pnand %p235, %p236
    %p238 = pneg %p237
    // Predicated region
    $region45: #{tpu_custom_call.1} parent=5 // pred_check
      _
    $region46: #{tpu_custom_call.1} parent=5 // pred_check_branch
      %240 = sbr.rel (%p237) target = $region48
    $region47: #{tpu_custom_call.1} parent=5 // pred_region
      %s241 = ssub.s32 %s13, 1
      %p242 = scmp.lt.s32.totalorder %s18, 2
      %s243 = scalar_select %p242, %s18, 2
      %s244 = smul.addr %s243, 8
      %s245 = scalar_lea.vmem %s0, %s244
      %p246 = pneg %p39
      %p247 = pneg %p36
      %p248 = pneg %p60
      %p249 = pneg %p57
      %p250 = pneg %p81
      %p251 = pneg %p78
      %p252 = pneg %p102
      %p253 = pneg %p99
      %p254 = pneg %p123
      %p255 = pneg %p120
      %p256 = pneg %p144
      %p257 = pneg %p141
      %p258 = pneg %p165
      %p259 = pneg %p162
      %p260 = pneg %p191
      %p261 = pneg %p188
      %p262 = scmp.lt.s32.totalorder %s18, 2
      %s263 = scalar_select %p262, %s18, 2
      %s264 = smul.addr %s263, 8
      %s265 = scalar_lea.vmem %s7, %s264
      %p266 = scmp.lt.s32.totalorder %s18, 2
      %s267 = scalar_select %p266, %s18, 2
      %s268 = smul.addr %s267, 8
      %s269 = scalar_lea.vmem %s0, %s268
      %p270 = scmp.lt.s32.totalorder %s18, 2
      %s271 = scalar_select %p270, %s18, 2
      %s272 = smul.addr %s271, 8
      %s273 = scalar_lea.vmem %s7, %s272
      %v274 = vld [vmem:[%s269] sm:$0xff]
      %v275 = vld [vmem:[%s1] sm:$0xff]
      %v276 = vld [vmem:[%s1 + $0x8] sm:$0xff]
      %v277 = vld [vmem:[%s2] sm:$0x1]
      %v279 = vlaneseq
      %v280 = vshrl.u32 %v279, 7
      %v281 = vsub.s32 0, %v280
      %v282 = vrot.slane %v277, %v281
      %vm284 = vcmask 130048
      %v286 = vsel %vm284, %v274, 0
      %288 = vmatprep.subr.mxu0 0.0
      %289 = vmatpush1.msra.mxu0 %v275
      %290 = vmatprep.subr.mxu0 0.0
      %291 = vmatpush1.msra.mxu0 %v276
      %292 = vmatprep.subr.mxu0 0.0
      %293 = vmatpush1.msra.mxu0 0.0
      %294 = vmatprep.subr.mxu0 0.0
      %295 = vmatpush1.msra.mxu0 0.0
      %296 = vmatprep.subr.mxu0 0.0
      %297 = vmatpush1.msra.mxu0 0.0
      %298 = vmatprep.subr.mxu0 0.0
      %299 = vmatpush1.msra.mxu0 0.0
      %300 = vmatprep.subr.mxu0 0.0
      %301 = vmatpush1.msra.mxu0 0.0
      %302 = vmatprep.subr.mxu0 0.0
      %303 = vmatpush1.msra.mxu0 0.0
      %304 = vmatprep.subr.mxu0 0.0
      %305 = vmatpush1.msra.mxu0 0.0
      %306 = vmatprep.subr.mxu0 0.0
      %307 = vmatpush1.msra.mxu0 0.0
      %308 = vmatprep.subr.mxu0 0.0
      %309 = vmatpush1.msra.mxu0 0.0
      %310 = vmatprep.subr.mxu0 0.0
      %311 = vmatpush1.msra.mxu0 0.0
      %312 = vmatprep.subr.mxu0 0.0
      %313 = vmatpush1.msra.mxu0 0.0
      %314 = vmatprep.subr.mxu0 0.0
      %315 = vmatpush1.msra.mxu0 0.0
      %316 = vmatprep.subr.mxu0 0.0
      %317 = vmatpush1.msra.mxu0 0.0
      %318 = vmatprep.subr.mxu0 0.0
      %319 = vmatpush1.msra.mxu0 0.0
      %320 = vmatprep.subr.mxu0 0.0
      %321 = vmatpush1.msra.mxu0 0.0
      %322 = vmatprep.subr.mxu0 0.0
      %323 = vmatpush1.msra.mxu0 0.0
      %324 = vmatprep.subr.mxu0 0.0
      %325 = vmatpush1.msra.mxu0 0.0
      %326 = vmatprep.subr.mxu0 0.0
      %327 = vmatpush1.msra.mxu0 0.0
      %328 = vmatprep.subr.mxu0 0.0
      %329 = vmatpush1.msra.mxu0 0.0
      %330 = vmatprep.subr.mxu0 0.0
      %331 = vmatpush1.msra.mxu0 0.0
      %332 = vmatprep.subr.mxu0 0.0
      %333 = vmatpush1.msra.mxu0 0.0
      %334 = vmatprep.subr.mxu0 0.0
      %335 = vmatpush1.msra.mxu0 0.0
      %336 = vmatprep.subr.mxu0 0.0
      %337 = vmatpush1.msra.mxu0 0.0
      %338 = vmatprep.subr.mxu0 0.0
      %339 = vmatpush1.msra.mxu0 0.0
      %340 = vmatprep.subr.mxu0 0.0
      %341 = vmatpush1.msra.mxu0 0.0
      %342 = vmatprep.subr.mxu0 0.0
      %343 = vmatpush1.msra.mxu0 0.0
      %344 = vmatprep.subr.mxu0 0.0
      %345 = vmatpush1.msra.mxu0 0.0
      %346 = vmatprep.subr.mxu0 0.0
      %347 = vmatpush1.msra.mxu0 0.0
      %348 = vmatprep.subr.mxu0 0.0
      %349 = vmatpush1.msra.mxu0 0.0
      %350 = vmatprep.subr.mxu0 0.0
      %351 = vmatpush1.msra.mxu0 0.0
      %352 = vmatprep.mubr.f32.mxu0 0.0
      %353 = vmatmul.mubr.f32.gmra.mrb[0].mxu0 %v286
      %v354 = vpop.f32.mrb[0].mxu0
      %v355 = vadd.f32 %v282, %v354
      %v356 = vpop.f32.mrb[0].mxu0
      %357 = vdwg.mxu0
      %v358 = vmax.f32 %v355, 0.0
      %v359 = vld [vmem:[%s3] sm:$0xff]
      %v360 = vld [vmem:[%s3 + $0x8] sm:$0xff]
      %v361 = vld [vmem:[%s3 + $0x10] sm:$0xff]
      %v362 = vld [vmem:[%s3 + $0x18] sm:$0xff]
      %v363 = vld [vmem:[%s4] sm:$0x1]
      %v365 = vlaneseq
      %v366 = vshrl.u32 %v365, 7
      %v367 = vsub.s32 0, %v366
      %v368 = vrot.slane %v363, %v367
      %vm370 = vcmask 261120
      %v372 = vsel %vm370, %v358, 0
      %374 = vmatprep.subr.mxu0 0.0
      %375 = vmatpush1.msra.mxu0 %v359
      %376 = vmatprep.subr.mxu0 0.0
      %377 = vmatpush1.msra.mxu0 %v360
      %378 = vmatprep.subr.mxu0 0.0
      %379 = vmatpush1.msra.mxu0 %v361
      %380 = vmatprep.subr.mxu0 0.0
      %381 = vmatpush1.msra.mxu0 %v362
      %382 = vmatprep.subr.mxu0 0.0
      %383 = vmatpush1.msra.mxu0 0.0
      %384 = vmatprep.subr.mxu0 0.0
      %385 = vmatpush1.msra.mxu0 0.0
      %386 = vmatprep.subr.mxu0 0.0
      %387 = vmatpush1.msra.mxu0 0.0
      %388 = vmatprep.subr.mxu0 0.0
      %389 = vmatpush1.msra.mxu0 0.0
      %390 = vmatprep.subr.mxu0 0.0
      %391 = vmatpush1.msra.mxu0 0.0
      %392 = vmatprep.subr.mxu0 0.0
      %393 = vmatpush1.msra.mxu0 0.0
      %394 = vmatprep.subr.mxu0 0.0
      %395 = vmatpush1.msra.mxu0 0.0
      %396 = vmatprep.subr.mxu0 0.0
      %397 = vmatpush1.msra.mxu0 0.0
      %398 = vmatprep.subr.mxu0 0.0
      %399 = vmatpush1.msra.mxu0 0.0
      %400 = vmatprep.subr.mxu0 0.0
      %401 = vmatpush1.msra.mxu0 0.0
      %402 = vmatprep.subr.mxu0 0.0
      %403 = vmatpush1.msra.mxu0 0.0
      %404 = vmatprep.subr.mxu0 0.0
      %405 = vmatpush1.msra.mxu0 0.0
      %406 = vmatprep.subr.mxu0 0.0
      %407 = vmatpush1.msra.mxu0 0.0
      %408 = vmatprep.subr.mxu0 0.0
      %409 = vmatpush1.msra.mxu0 0.0
      %410 = vmatprep.subr.mxu0 0.0
      %411 = vmatpush1.msra.mxu0 0.0
      %412 = vmatprep.subr.mxu0 0.0
      %413 = vmatpush1.msra.mxu0 0.0
      %414 = vmatprep.subr.mxu0 0.0
      %415 = vmatpush1.msra.mxu0 0.0
      %416 = vmatprep.subr.mxu0 0.0
      %417 = vmatpush1.msra.mxu0 0.0
      %418 = vmatprep.subr.mxu0 0.0
      %419 = vmatpush1.msra.mxu0 0.0
      %420 = vmatprep.subr.mxu0 0.0
      %421 = vmatpush1.msra.mxu0 0.0
      %422 = vmatprep.subr.mxu0 0.0
      %423 = vmatpush1.msra.mxu0 0.0
      %424 = vmatprep.subr.mxu0 0.0
      %425 = vmatpush1.msra.mxu0 0.0
      %426 = vmatprep.subr.mxu0 0.0
      %427 = vmatpush1.msra.mxu0 0.0
      %428 = vmatprep.subr.mxu0 0.0
      %429 = vmatpush1.msra.mxu0 0.0
      %430 = vmatprep.subr.mxu0 0.0
      %431 = vmatpush1.msra.mxu0 0.0
      %432 = vmatprep.subr.mxu0 0.0
      %433 = vmatpush1.msra.mxu0 0.0
      %434 = vmatprep.subr.mxu0 0.0
      %435 = vmatpush1.msra.mxu0 0.0
      %436 = vmatprep.subr.mxu0 0.0
      %437 = vmatpush1.msra.mxu0 0.0
      %438 = vmatprep.mubr.f32.mxu0 0.0
      %439 = vmatmul.mubr.f32.gmra.mrb[0].mxu0 %v372
      %v440 = vpop.f32.mrb[0].mxu0
      %v441 = vadd.f32 %v368, %v440
      %v442 = vpop.f32.mrb[0].mxu0
      %443 = vdwg.mxu0
      %v444 = vmax.f32 %v441, 0.0
      %v445 = vld [vmem:[%s5] sm:$0xff]
      %v446 = vld [vmem:[%s5 + $0x8] sm:$0xff]
      %v447 = vld [vmem:[%s5 + $0x10] sm:$0xff]
      %v448 = vld [vmem:[%s5 + $0x18] sm:$0xff]
      %v449 = vld [vmem:[%s6] sm:$0x1]
      %v451 = vlaneseq
      %v452 = vshrl.u32 %v451, 7
      %v453 = vsub.s32 0, %v452
      %v454 = vrot.slane %v449, %v453
      %v457 = vsel %vm370, %v444, 0
      %459 = vmatprep.subr.mxu0 0.0
      %460 = vmatpush1.msra.mxu0 %v445
      %461 = vmatprep.subr.mxu0 0.0
      %462 = vmatpush1.msra.mxu0 %v446
      %463 = vmatprep.subr.mxu0 0.0
      %464 = vmatpush1.msra.mxu0 %v447
      %465 = vmatprep.subr.mxu0 0.0
      %466 = vmatpush1.msra.mxu0 %v448
      %467 = vmatprep.subr.mxu0 0.0
      %468 = vmatpush1.msra.mxu0 0.0
      %469 = vmatprep.subr.mxu0 0.0
      %470 = vmatpush1.msra.mxu0 0.0
      %471 = vmatprep.subr.mxu0 0.0
      %472 = vmatpush1.msra.mxu0 0.0
      %473 = vmatprep.subr.mxu0 0.0
      %474 = vmatpush1.msra.mxu0 0.0
      %475 = vmatprep.subr.mxu0 0.0
      %476 = vmatpush1.msra.mxu0 0.0
      %477 = vmatprep.subr.mxu0 0.0
      %478 = vmatpush1.msra.mxu0 0.0
      %479 = vmatprep.subr.mxu0 0.0
      %480 = vmatpush1.msra.mxu0 0.0
      %481 = vmatprep.subr.mxu0 0.0
      %482 = vmatpush1.msra.mxu0 0.0
      %483 = vmatprep.subr.mxu0 0.0
      %484 = vmatpush1.msra.mxu0 0.0
      %485 = vmatprep.subr.mxu0 0.0
      %486 = vmatpush1.msra.mxu0 0.0
      %487 = vmatprep.subr.mxu0 0.0
      %488 = vmatpush1.msra.mxu0 0.0
      %489 = vmatprep.subr.mxu0 0.0
      %490 = vmatpush1.msra.mxu0 0.0
      %491 = vmatprep.subr.mxu0 0.0
      %492 = vmatpush1.msra.mxu0 0.0
      %493 = vmatprep.subr.mxu0 0.0
      %494 = vmatpush1.msra.mxu0 0.0
      %495 = vmatprep.subr.mxu0 0.0
      %496 = vmatpush1.msra.mxu0 0.0
      %497 = vmatprep.subr.mxu0 0.0
      %498 = vmatpush1.msra.mxu0 0.0
      %499 = vmatprep.subr.mxu0 0.0
      %500 = vmatpush1.msra.mxu0 0.0
      %501 = vmatprep.subr.mxu0 0.0
      %502 = vmatpush1.msra.mxu0 0.0
      %503 = vmatprep.subr.mxu0 0.0
      %504 = vmatpush1.msra.mxu0 0.0
      %505 = vmatprep.subr.mxu0 0.0
      %506 = vmatpush1.msra.mxu0 0.0
      %507 = vmatprep.subr.mxu0 0.0
      %508 = vmatpush1.msra.mxu0 0.0
      %509 = vmatprep.subr.mxu0 0.0
      %510 = vmatpush1.msra.mxu0 0.0
      %511 = vmatprep.subr.mxu0 0.0
      %512 = vmatpush1.msra.mxu0 0.0
      %513 = vmatprep.subr.mxu0 0.0
      %514 = vmatpush1.msra.mxu0 0.0
      %515 = vmatprep.subr.mxu0 0.0
      %516 = vmatpush1.msra.mxu0 0.0
      %517 = vmatprep.subr.mxu0 0.0
      %518 = vmatpush1.msra.mxu0 0.0
      %519 = vmatprep.subr.mxu0 0.0
      %520 = vmatpush1.msra.mxu0 0.0
      %521 = vmatprep.subr.mxu0 0.0
      %522 = vmatpush1.msra.mxu0 0.0
      %523 = vmatprep.mubr.f32.mxu0 0.0
      %524 = vmatmul.mubr.f32.gmra.mrb[0].mxu0 %v457
      %v525 = vpop.f32.mrb[0].mxu0
      %v526 = vadd.f32 %v454, %v525
      %v527 = vpop.f32.mrb[0].mxu0
      %528 = vdwg.mxu0
      %vm529 = vcmask 64512
      %v530 = vsel %vm529, %v526, -inf
      %531 = vmax.xlane.f32.xlu0 %v530
      %v532 = vpop.xlane.xlu0 %531
      %v533 = vsub.f32 %v526, %v532
      %v534 = vmul.f32 %v533, 1.442695
      %v535 = vpow.pop %v534
      %v536 = vsel %vm529, %v535, 0.0
      %537 = vadd.xlane.f32.xlu0 %v536
      %v538 = vpop.xlane.xlu0 %537
      %v539 = vrcp.pop %v538
      %v540 = vmul.f32 %v535, %v539
      %541 = vst.msk [vmem:[%s273] sm:$0xff] %vm529, %v540
      %p542 = scmp.lt.s32.totalorder %s18, 2
      %s543 = scalar_select %p542, %s18, 2
      %s544 = smul.addr %s543, 8
      %s545 = scalar_lea.vmem %s7, %s544
      // Predicated region
      $region49: #{tpu_custom_call.1} parent=47 // pred_check
        %p546 = pneg %p188
      $region50: #{tpu_custom_call.1} parent=47 // pred_check_branch
        %548 = sbr.rel (%p546) target = $region52
      $region51: #{tpu_custom_call.1} parent=47 // pred_region
        _
      $region52: #{tpu_custom_call.1} parent=47 // pred_fallthru
        _
    $region48: #{tpu_custom_call.1} parent=5 // pred_fallthru
      _
    %p549 = scmp.le.s32.totalorder 2, %s13
    // Predicated region
    $region53: #{tpu_custom_call.1} parent=5 // pred_check
      %p550 = pneg %p549
    $region54: #{tpu_custom_call.1} parent=5 // pred_check_branch
      %552 = sbr.rel (%p550) target = $region56
    $region55: #{tpu_custom_call.1} parent=5 // pred_region
      %s553 = ssub.s32 %s13, 2
      // Predicated region
      $region57: #{tpu_custom_call.1} parent=55 // pred_check
        %p554 = pneg %p194
      $region58: #{tpu_custom_call.1} parent=55 // pred_check_branch
        %556 = sbr.rel (%p554) target = $region60
      $region59: #{tpu_custom_call.1} parent=55 // pred_region
        %p557 = scmp.lt.s32.totalorder %s19, 2
        %s558 = scalar_select %p557, %s19, 2
        %s559 = smul.addr %s558, 8
        %s560 = scalar_lea.vmem %s7, %s559
      $region60: #{tpu_custom_call.1} parent=55 // pred_fallthru
        _
    $region56: #{tpu_custom_call.1} parent=5 // pred_fallthru
      _
  $region6: #{tpu_custom_call.1} parent=0 // loop_footer
    %s17 = sadd.s32 1, %s13
  $region7: #{tpu_custom_call.1} parent=0 // loop_footer_branch
    %12 = sbr.rel target = $region3
  $region8: #{tpu_custom_call.1} parent=0 // loop_exit
    _

</llo_original>
